<compile_context>
chip_gen: v7x
topology: tpu7x:2x2x1
jax: 0.10.0
libtpu: 0.0.40
codegen_flags: <defaults>
</compile_context>

<pallas_src>
import jax
import jax.numpy as jnp
from jax.experimental import pallas as pl
from jax.experimental.pallas import tpu as pltpu


def context_gating_kernel(x_ref, w_ref, b_ref, o_ref):
    # x_ref: (Nb, C, HW) in VMEM
    # w_ref: (C, C) torch-style (out, in) in SMEM (scalar reads)
    # b_ref: (C,) in SMEM (scalar reads)
    # o_ref: (Nb, C, HW) in VMEM
    x = x_ref[...].astype(jnp.float32)          # compute in f32 (v5e VPU has no bf16)
    C = x_ref.shape[1]
    # Unrolled VPU channel mix: lin[n, c, hw] = sum_k W[c, k] * x[n, k, hw] + b[c]
    for c in range(C):                          # static unroll, C is tiny
        acc = x[:, 0, :] * w_ref[c, 0]          # (Nb, HW) scalar-broadcast mul (VPU)
        for k in range(1, C):
            acc = acc + x[:, k, :] * w_ref[c, k]
        acc = acc + b_ref[c]
        gate = jax.nn.sigmoid(acc)              # EUP transcendental
        # Lane-dense store (HW on lanes), one channel row per store.
        o_ref[:, c, :] = (x[:, c, :] * gate).astype(o_ref.dtype)


def context_gating_forward(x_nchw, w, b, *, max_block_bytes=4 << 20):
    """x_nchw: (N, C, H, W); w: (C, C) torch Linear weight (out, in); b: (C,)."""
    N, C, H, W = x_nchw.shape
    HW = H * W
    xm = x_nchw.reshape(N, C, HW)               # free reshape, stays NCHW-major

    # Chunk only along the batch axis if the whole thing wouldn't fit in VMEM
    # comfortably; for the test-sized input nb == N -> a single grid step.
    bytes_per_image = C * HW * x_nchw.dtype.itemsize
    nb = max(1, min(N, max_block_bytes // max(1, bytes_per_image)))
    grid = (pl.cdiv(N, nb),)

    out = pl.pallas_call(
        context_gating_kernel,
        out_shape=jax.ShapeDtypeStruct((N, C, HW), x_nchw.dtype),
        grid=grid,
        in_specs=[
            pl.BlockSpec((nb, C, HW), lambda i: (i, 0, 0)),          # activations -> VMEM
            pl.BlockSpec(memory_space=pltpu.MemorySpace.SMEM),       # weights (16 scalars)
            pl.BlockSpec(memory_space=pltpu.MemorySpace.SMEM),       # bias (4 scalars)
        ],
        out_specs=pl.BlockSpec((nb, C, HW), lambda i: (i, 0, 0)),
        compiler_params=pltpu.CompilerParams(
            dimension_semantics=("parallel",)),   # independent batch chunks
    )(xm, w, b)
    return out.reshape(N, C, H, W)


def context_gating_ref(x, w, b):
    """Pure-JAX mirror of the PyTorch forward."""
    xt = jnp.transpose(x, (0, 2, 3, 1))            # NCHW -> NHWC
    lin = xt @ w.T + b                             # nn.Linear
    lin = jnp.transpose(lin, (0, 3, 1, 2))         # NHWC -> NCHW
    return x * jax.nn.sigmoid(lin)


if __name__ == "__main__":
    key = jax.random.PRNGKey(0)
    kx, kw, kb = jax.random.split(key, 3)

    N, C, H, W = 2, 4, 16, 16
    x = jax.random.normal(kx, (N, C, H, W), jnp.float32)       # NCHW, like PyTorch
    w = 0.3 * jax.random.normal(kw, (C, C), jnp.float32)       # Linear weight (out, in)
    b = 0.1 * jax.random.normal(kb, (C,), jnp.float32)         # Linear bias

    y = context_gating_forward(x, w, b)
    y = jax.block_until_ready(y)

    ref = context_gating_ref(x, w, b)
    assert y.shape == (N, C, H, W)
    assert y.dtype == x.dtype
    assert jnp.allclose(y, ref, atol=1e-5, rtol=1e-5), float(jnp.max(jnp.abs(y - ref)))
    print("KERNEL_OK")
</pallas_src>

<mosaic_0001>
module attributes {stable_mosaic.version = 11 : i64} {
  func.func @context_gating_kernel(%arg0: i32, %arg1: memref<2x4x256xf32, #tpu.memory_space<vmem>>, %arg2: memref<4x4xf32, #tpu.memory_space<smem>>, %arg3: memref<4xf32, #tpu.memory_space<smem>>, %arg4: memref<2x4x256xf32, #tpu.memory_space<vmem>>) attributes {dimension_semantics = [#tpu.dimension_semantics<parallel>], iteration_bounds = array<i64: 1>, scalar_prefetch = 0 : i64, scratch_operands = 0 : i64, tpu.core_type = #tpu.core_type<tc>, window_params = [{transform_indices = @transform_0, window_bounds = array<i64: 2, 4, 256>}, {transform_indices = @transform_1, window_bounds = array<i64: 4, 4>}, {transform_indices = @transform_2, window_bounds = array<i64: 4>}, {transform_indices = @transform_3, window_bounds = array<i64: 2, 4, 256>}]} {
    %c0 = arith.constant 0 : index
    %c0_0 = arith.constant 0 : index
    %c0_1 = arith.constant 0 : index
    %0 = vector.load %arg1[%c0, %c0_0, %c0_1] : memref<2x4x256xf32, #tpu.memory_space<vmem>>, vector<2x4x256xf32>
    %1 = vector.extract_strided_slice %0 {offsets = [0, 0, 0], sizes = [2, 1, 256], strides = [1, 1, 1]} : vector<2x4x256xf32> to vector<2x1x256xf32>
    %2 = vector.shape_cast %1 : vector<2x1x256xf32> to vector<2x256xf32>
    %c0_2 = arith.constant 0 : index
    %c0_3 = arith.constant 0 : index
    %3 = memref.load %arg2[%c0_2, %c0_3] : memref<4x4xf32, #tpu.memory_space<smem>>
    %4 = vector.broadcast %3 : f32 to vector<2x256xf32>
    %5 = arith.mulf %2, %4 : vector<2x256xf32>
    %6 = vector.extract_strided_slice %0 {offsets = [0, 1, 0], sizes = [2, 1, 256], strides = [1, 1, 1]} : vector<2x4x256xf32> to vector<2x1x256xf32>
    %7 = vector.shape_cast %6 : vector<2x1x256xf32> to vector<2x256xf32>
    %c0_4 = arith.constant 0 : index
    %c1 = arith.constant 1 : index
    %8 = memref.load %arg2[%c0_4, %c1] : memref<4x4xf32, #tpu.memory_space<smem>>
    %9 = vector.broadcast %8 : f32 to vector<2x256xf32>
    %10 = arith.mulf %7, %9 : vector<2x256xf32>
    %11 = arith.addf %5, %10 : vector<2x256xf32>
    %12 = vector.extract_strided_slice %0 {offsets = [0, 2, 0], sizes = [2, 1, 256], strides = [1, 1, 1]} : vector<2x4x256xf32> to vector<2x1x256xf32>
    %13 = vector.shape_cast %12 : vector<2x1x256xf32> to vector<2x256xf32>
    %c0_5 = arith.constant 0 : index
    %c2 = arith.constant 2 : index
    %14 = memref.load %arg2[%c0_5, %c2] : memref<4x4xf32, #tpu.memory_space<smem>>
    %15 = vector.broadcast %14 : f32 to vector<2x256xf32>
    %16 = arith.mulf %13, %15 : vector<2x256xf32>
    %17 = arith.addf %11, %16 : vector<2x256xf32>
    %18 = vector.extract_strided_slice %0 {offsets = [0, 3, 0], sizes = [2, 1, 256], strides = [1, 1, 1]} : vector<2x4x256xf32> to vector<2x1x256xf32>
    %19 = vector.shape_cast %18 : vector<2x1x256xf32> to vector<2x256xf32>
    %c0_6 = arith.constant 0 : index
    %c3 = arith.constant 3 : index
    %20 = memref.load %arg2[%c0_6, %c3] : memref<4x4xf32, #tpu.memory_space<smem>>
    %21 = vector.broadcast %20 : f32 to vector<2x256xf32>
    %22 = arith.mulf %19, %21 : vector<2x256xf32>
    %23 = arith.addf %17, %22 : vector<2x256xf32>
    %c0_7 = arith.constant 0 : index
    %24 = memref.load %arg3[%c0_7] : memref<4xf32, #tpu.memory_space<smem>>
    %25 = vector.broadcast %24 : f32 to vector<2x256xf32>
    %26 = arith.addf %23, %25 : vector<2x256xf32>
    %27 = arith.negf %26 : vector<2x256xf32>
    %28 = math.exp %27 : vector<2x256xf32>
    %cst = arith.constant 1.000000e+00 : f32
    %29 = vector.broadcast %cst : f32 to vector<2x256xf32>
    %30 = arith.addf %29, %28 : vector<2x256xf32>
    %31 = arith.divf %29, %30 : vector<2x256xf32>
    %32 = vector.extract_strided_slice %0 {offsets = [0, 0, 0], sizes = [2, 1, 256], strides = [1, 1, 1]} : vector<2x4x256xf32> to vector<2x1x256xf32>
    %33 = vector.shape_cast %32 : vector<2x1x256xf32> to vector<2x256xf32>
    %34 = arith.mulf %33, %31 : vector<2x256xf32>
    %c0_8 = arith.constant 0 : index
    %c0_9 = arith.constant 0 : index
    %c0_10 = arith.constant 0 : index
    %35 = vector.load %arg4[%c0_8, %c0_9, %c0_10] : memref<2x4x256xf32, #tpu.memory_space<vmem>>, vector<2x1x256xf32>
    %36 = vector.shape_cast %35 : vector<2x1x256xf32> to vector<2x256xf32>
    %37 = vector.shape_cast %34 : vector<2x256xf32> to vector<2x1x256xf32>
    tpu.vector_store %arg4[%c0_8, %c0_9, %c0_10], %37 {strides = array<i32>} : memref<2x4x256xf32, #tpu.memory_space<vmem>>, vector<2x1x256xf32>,
    %38 = vector.extract_strided_slice %0 {offsets = [0, 0, 0], sizes = [2, 1, 256], strides = [1, 1, 1]} : vector<2x4x256xf32> to vector<2x1x256xf32>
    %39 = vector.shape_cast %38 : vector<2x1x256xf32> to vector<2x256xf32>
    %c1_11 = arith.constant 1 : index
    %c0_12 = arith.constant 0 : index
    %40 = memref.load %arg2[%c1_11, %c0_12] : memref<4x4xf32, #tpu.memory_space<smem>>
    %41 = vector.broadcast %40 : f32 to vector<2x256xf32>
    %42 = arith.mulf %39, %41 : vector<2x256xf32>
    %43 = vector.extract_strided_slice %0 {offsets = [0, 1, 0], sizes = [2, 1, 256], strides = [1, 1, 1]} : vector<2x4x256xf32> to vector<2x1x256xf32>
    %44 = vector.shape_cast %43 : vector<2x1x256xf32> to vector<2x256xf32>
    %c1_13 = arith.constant 1 : index
    %c1_14 = arith.constant 1 : index
    %45 = memref.load %arg2[%c1_13, %c1_14] : memref<4x4xf32, #tpu.memory_space<smem>>
    %46 = vector.broadcast %45 : f32 to vector<2x256xf32>
    %47 = arith.mulf %44, %46 : vector<2x256xf32>
    %48 = arith.addf %42, %47 : vector<2x256xf32>
    %49 = vector.extract_strided_slice %0 {offsets = [0, 2, 0], sizes = [2, 1, 256], strides = [1, 1, 1]} : vector<2x4x256xf32> to vector<2x1x256xf32>
    %50 = vector.shape_cast %49 : vector<2x1x256xf32> to vector<2x256xf32>
    %c1_15 = arith.constant 1 : index
    %c2_16 = arith.constant 2 : index
    %51 = memref.load %arg2[%c1_15, %c2_16] : memref<4x4xf32, #tpu.memory_space<smem>>
    %52 = vector.broadcast %51 : f32 to vector<2x256xf32>
    %53 = arith.mulf %50, %52 : vector<2x256xf32>
    %54 = arith.addf %48, %53 : vector<2x256xf32>
    %55 = vector.extract_strided_slice %0 {offsets = [0, 3, 0], sizes = [2, 1, 256], strides = [1, 1, 1]} : vector<2x4x256xf32> to vector<2x1x256xf32>
    %56 = vector.shape_cast %55 : vector<2x1x256xf32> to vector<2x256xf32>
    %c1_17 = arith.constant 1 : index
    %c3_18 = arith.constant 3 : index
    %57 = memref.load %arg2[%c1_17, %c3_18] : memref<4x4xf32, #tpu.memory_space<smem>>
    %58 = vector.broadcast %57 : f32 to vector<2x256xf32>
    %59 = arith.mulf %56, %58 : vector<2x256xf32>
    %60 = arith.addf %54, %59 : vector<2x256xf32>
    %c1_19 = arith.constant 1 : index
    %61 = memref.load %arg3[%c1_19] : memref<4xf32, #tpu.memory_space<smem>>
    %62 = vector.broadcast %61 : f32 to vector<2x256xf32>
    %63 = arith.addf %60, %62 : vector<2x256xf32>
    %64 = arith.negf %63 : vector<2x256xf32>
    %65 = math.exp %64 : vector<2x256xf32>
    %cst_20 = arith.constant 1.000000e+00 : f32
    %66 = vector.broadcast %cst_20 : f32 to vector<2x256xf32>
    %67 = arith.addf %66, %65 : vector<2x256xf32>
    %68 = arith.divf %66, %67 : vector<2x256xf32>
    %69 = vector.extract_strided_slice %0 {offsets = [0, 1, 0], sizes = [2, 1, 256], strides = [1, 1, 1]} : vector<2x4x256xf32> to vector<2x1x256xf32>
    %70 = vector.shape_cast %69 : vector<2x1x256xf32> to vector<2x256xf32>
    %71 = arith.mulf %70, %68 : vector<2x256xf32>
    %c0_21 = arith.constant 0 : index
    %c1_22 = arith.constant 1 : index
    %c0_23 = arith.constant 0 : index
    %72 = vector.load %arg4[%c0_21, %c1_22, %c0_23] : memref<2x4x256xf32, #tpu.memory_space<vmem>>, vector<2x1x256xf32>
    %73 = vector.shape_cast %72 : vector<2x1x256xf32> to vector<2x256xf32>
    %74 = vector.shape_cast %71 : vector<2x256xf32> to vector<2x1x256xf32>
    tpu.vector_store %arg4[%c0_21, %c1_22, %c0_23], %74 {strides = array<i32>} : memref<2x4x256xf32, #tpu.memory_space<vmem>>, vector<2x1x256xf32>,
    %75 = vector.extract_strided_slice %0 {offsets = [0, 0, 0], sizes = [2, 1, 256], strides = [1, 1, 1]} : vector<2x4x256xf32> to vector<2x1x256xf32>
    %76 = vector.shape_cast %75 : vector<2x1x256xf32> to vector<2x256xf32>
    %c2_24 = arith.constant 2 : index
    %c0_25 = arith.constant 0 : index
    %77 = memref.load %arg2[%c2_24, %c0_25] : memref<4x4xf32, #tpu.memory_space<smem>>
    %78 = vector.broadcast %77 : f32 to vector<2x256xf32>
    %79 = arith.mulf %76, %78 : vector<2x256xf32>
    %80 = vector.extract_strided_slice %0 {offsets = [0, 1, 0], sizes = [2, 1, 256], strides = [1, 1, 1]} : vector<2x4x256xf32> to vector<2x1x256xf32>
    %81 = vector.shape_cast %80 : vector<2x1x256xf32> to vector<2x256xf32>
    %c2_26 = arith.constant 2 : index
    %c1_27 = arith.constant 1 : index
    %82 = memref.load %arg2[%c2_26, %c1_27] : memref<4x4xf32, #tpu.memory_space<smem>>
    %83 = vector.broadcast %82 : f32 to vector<2x256xf32>
    %84 = arith.mulf %81, %83 : vector<2x256xf32>
    %85 = arith.addf %79, %84 : vector<2x256xf32>
    %86 = vector.extract_strided_slice %0 {offsets = [0, 2, 0], sizes = [2, 1, 256], strides = [1, 1, 1]} : vector<2x4x256xf32> to vector<2x1x256xf32>
    %87 = vector.shape_cast %86 : vector<2x1x256xf32> to vector<2x256xf32>
    %c2_28 = arith.constant 2 : index
    %c2_29 = arith.constant 2 : index
    %88 = memref.load %arg2[%c2_28, %c2_29] : memref<4x4xf32, #tpu.memory_space<smem>>
    %89 = vector.broadcast %88 : f32 to vector<2x256xf32>
    %90 = arith.mulf %87, %89 : vector<2x256xf32>
    %91 = arith.addf %85, %90 : vector<2x256xf32>
    %92 = vector.extract_strided_slice %0 {offsets = [0, 3, 0], sizes = [2, 1, 256], strides = [1, 1, 1]} : vector<2x4x256xf32> to vector<2x1x256xf32>
    %93 = vector.shape_cast %92 : vector<2x1x256xf32> to vector<2x256xf32>
    %c2_30 = arith.constant 2 : index
    %c3_31 = arith.constant 3 : index
    %94 = memref.load %arg2[%c2_30, %c3_31] : memref<4x4xf32, #tpu.memory_space<smem>>
    %95 = vector.broadcast %94 : f32 to vector<2x256xf32>
    %96 = arith.mulf %93, %95 : vector<2x256xf32>
    %97 = arith.addf %91, %96 : vector<2x256xf32>
    %c2_32 = arith.constant 2 : index
    %98 = memref.load %arg3[%c2_32] : memref<4xf32, #tpu.memory_space<smem>>
    %99 = vector.broadcast %98 : f32 to vector<2x256xf32>
    %100 = arith.addf %97, %99 : vector<2x256xf32>
    %101 = arith.negf %100 : vector<2x256xf32>
    %102 = math.exp %101 : vector<2x256xf32>
    %cst_33 = arith.constant 1.000000e+00 : f32
    %103 = vector.broadcast %cst_33 : f32 to vector<2x256xf32>
    %104 = arith.addf %103, %102 : vector<2x256xf32>
    %105 = arith.divf %103, %104 : vector<2x256xf32>
    %106 = vector.extract_strided_slice %0 {offsets = [0, 2, 0], sizes = [2, 1, 256], strides = [1, 1, 1]} : vector<2x4x256xf32> to vector<2x1x256xf32>
    %107 = vector.shape_cast %106 : vector<2x1x256xf32> to vector<2x256xf32>
    %108 = arith.mulf %107, %105 : vector<2x256xf32>
    %c0_34 = arith.constant 0 : index
    %c2_35 = arith.constant 2 : index
    %c0_36 = arith.constant 0 : index
    %109 = vector.load %arg4[%c0_34, %c2_35, %c0_36] : memref<2x4x256xf32, #tpu.memory_space<vmem>>, vector<2x1x256xf32>
    %110 = vector.shape_cast %109 : vector<2x1x256xf32> to vector<2x256xf32>
    %111 = vector.shape_cast %108 : vector<2x256xf32> to vector<2x1x256xf32>
    tpu.vector_store %arg4[%c0_34, %c2_35, %c0_36], %111 {strides = array<i32>} : memref<2x4x256xf32, #tpu.memory_space<vmem>>, vector<2x1x256xf32>,
    %112 = vector.extract_strided_slice %0 {offsets = [0, 0, 0], sizes = [2, 1, 256], strides = [1, 1, 1]} : vector<2x4x256xf32> to vector<2x1x256xf32>
    %113 = vector.shape_cast %112 : vector<2x1x256xf32> to vector<2x256xf32>
    %c3_37 = arith.constant 3 : index
    %c0_38 = arith.constant 0 : index
    %114 = memref.load %arg2[%c3_37, %c0_38] : memref<4x4xf32, #tpu.memory_space<smem>>
    %115 = vector.broadcast %114 : f32 to vector<2x256xf32>
    %116 = arith.mulf %113, %115 : vector<2x256xf32>
    %117 = vector.extract_strided_slice %0 {offsets = [0, 1, 0], sizes = [2, 1, 256], strides = [1, 1, 1]} : vector<2x4x256xf32> to vector<2x1x256xf32>
    %118 = vector.shape_cast %117 : vector<2x1x256xf32> to vector<2x256xf32>
    %c3_39 = arith.constant 3 : index
    %c1_40 = arith.constant 1 : index
    %119 = memref.load %arg2[%c3_39, %c1_40] : memref<4x4xf32, #tpu.memory_space<smem>>
    %120 = vector.broadcast %119 : f32 to vector<2x256xf32>
    %121 = arith.mulf %118, %120 : vector<2x256xf32>
    %122 = arith.addf %116, %121 : vector<2x256xf32>
    %123 = vector.extract_strided_slice %0 {offsets = [0, 2, 0], sizes = [2, 1, 256], strides = [1, 1, 1]} : vector<2x4x256xf32> to vector<2x1x256xf32>
    %124 = vector.shape_cast %123 : vector<2x1x256xf32> to vector<2x256xf32>
    %c3_41 = arith.constant 3 : index
    %c2_42 = arith.constant 2 : index
    %125 = memref.load %arg2[%c3_41, %c2_42] : memref<4x4xf32, #tpu.memory_space<smem>>
    %126 = vector.broadcast %125 : f32 to vector<2x256xf32>
    %127 = arith.mulf %124, %126 : vector<2x256xf32>
    %128 = arith.addf %122, %127 : vector<2x256xf32>
    %129 = vector.extract_strided_slice %0 {offsets = [0, 3, 0], sizes = [2, 1, 256], strides = [1, 1, 1]} : vector<2x4x256xf32> to vector<2x1x256xf32>
    %130 = vector.shape_cast %129 : vector<2x1x256xf32> to vector<2x256xf32>
    %c3_43 = arith.constant 3 : index
    %c3_44 = arith.constant 3 : index
    %131 = memref.load %arg2[%c3_43, %c3_44] : memref<4x4xf32, #tpu.memory_space<smem>>
    %132 = vector.broadcast %131 : f32 to vector<2x256xf32>
    %133 = arith.mulf %130, %132 : vector<2x256xf32>
    %134 = arith.addf %128, %133 : vector<2x256xf32>
    %c3_45 = arith.constant 3 : index
    %135 = memref.load %arg3[%c3_45] : memref<4xf32, #tpu.memory_space<smem>>
    %136 = vector.broadcast %135 : f32 to vector<2x256xf32>
    %137 = arith.addf %134, %136 : vector<2x256xf32>
    %138 = arith.negf %137 : vector<2x256xf32>
    %139 = math.exp %138 : vector<2x256xf32>
    %cst_46 = arith.constant 1.000000e+00 : f32
    %140 = vector.broadcast %cst_46 : f32 to vector<2x256xf32>
    %141 = arith.addf %140, %139 : vector<2x256xf32>
    %142 = arith.divf %140, %141 : vector<2x256xf32>
    %143 = vector.extract_strided_slice %0 {offsets = [0, 3, 0], sizes = [2, 1, 256], strides = [1, 1, 1]} : vector<2x4x256xf32> to vector<2x1x256xf32>
    %144 = vector.shape_cast %143 : vector<2x1x256xf32> to vector<2x256xf32>
    %145 = arith.mulf %144, %142 : vector<2x256xf32>
    %c0_47 = arith.constant 0 : index
    %c3_48 = arith.constant 3 : index
    %c0_49 = arith.constant 0 : index
    %146 = vector.load %arg4[%c0_47, %c3_48, %c0_49] : memref<2x4x256xf32, #tpu.memory_space<vmem>>, vector<2x1x256xf32>
    %147 = vector.shape_cast %146 : vector<2x1x256xf32> to vector<2x256xf32>
    %148 = vector.shape_cast %145 : vector<2x256xf32> to vector<2x1x256xf32>
    tpu.vector_store %arg4[%c0_47, %c3_48, %c0_49], %148 {strides = array<i32>} : memref<2x4x256xf32, #tpu.memory_space<vmem>>, vector<2x1x256xf32>,
    return
  }
  func.func @transform_0(%arg0: i32) -> (i32, i32, i32) {
    %c0_i32 = arith.constant 0 : i32
    %c0_i32_0 = arith.constant 0 : i32
    %c0_i32_1 = arith.constant 0 : i32
    return %arg0, %c0_i32, %c0_i32_0 : i32, i32, i32
  }
  func.func @transform_1(%arg0: i32) -> (i32, i32) {
    %c0_i32 = arith.constant 0 : i32
    %c0_i32_0 = arith.constant 0 : i32
    %c0_i32_1 = arith.constant 0 : i32
    return %c0_i32, %c0_i32_0 : i32, i32
  }
  func.func @transform_2(%arg0: i32) -> i32 {
    %c0_i32 = arith.constant 0 : i32
    %c0_i32_0 = arith.constant 0 : i32
    return %c0_i32 : i32
  }
  func.func @transform_3(%arg0: i32) -> (i32, i32, i32) {
    %c0_i32 = arith.constant 0 : i32
    %c0_i32_0 = arith.constant 0 : i32
    %c0_i32_1 = arith.constant 0 : i32
    return %arg0, %c0_i32, %c0_i32_0 : i32, i32, i32
  }
}

</mosaic_0001>

<llo_original>
// kernel: tpu_custom_call.1
$region0: #{tpu_custom_call.1}
  #allocation0 [shape = 'u32[]', space=smem, size = 0x4, offset = 0x4, fixed_abs, tag = 'smem constant byte address 0x4 - core index']
  #allocation1 [shape = 'u32[144,128]{1,0:T(1,128)}', space=vmem, size = 0x12000, scoped, tag = 'internal scratch']
  %s0 = inlined_call_operand.hbm [shape: f32[2,4,256], index: 0, kind: input, shape index: {}]
  %s1 = inlined_call_operand.hbm [shape: f32[4,4], index: 1, kind: input, shape index: {}]
  %s2 = inlined_call_operand.vmem [shape: f32[4], index: 2, kind: input, shape index: {}]
  %s3 = inlined_call_operand.hbm [shape: f32[2,4,256], index: 3, kind: output, shape index: {}]
  %s4 = sld [smem:[#allocation0]]
  $region34: #{tpu_custom_call.1} parent=0
    _
  %s6 = ssub.s32 1, %s4
  %s7 = scalar_select 0, %s6, %s4
  $region1: #{tpu_custom_call.1} parent=0
    #allocation2 [shape = 'u8[8192]{0}', space=vmem, size = 0x2000, scoped, tag = 'input window, operand 0, single buffered']
    #allocation3 [shape = 's32[1]{0}', space=sflag, size = 0x4, scoped, tag = 'scoped memory for tpu_custom_call.1']
    #allocation4 [shape = 's32[1]{0}', space=sflag, size = 0x4, scoped, tag = 'scoped memory for tpu_custom_call.1']
    #allocation5 [shape = 's32[1]{0}', space=sflag, size = 0x4, scoped, tag = 'scoped memory for tpu_custom_call.1']
    #allocation6 [shape = 's32[1]{0}', space=sflag, size = 0x4, scoped, tag = 'scoped memory for tpu_custom_call.1']
    #allocation7 [shape = 'u8[2048]{0}', space=smem, size = 0x800, scoped, tag = 'input window, operand 1, single buffered']
    #allocation8 [shape = 'u8[512]{0}', space=smem, size = 0x200, scoped, tag = 'input window, operand 2, single buffered']
    #allocation9 [shape = 'u8[8192]{0}', space=vmem, size = 0x2000, scoped, tag = 'output window, operand 0, single buffered']
    %8 = vsyncpa [#allocation3], 0
    %9 = vsyncpa [#allocation5], 0
    %10 = vsyncpa [#allocation6], 0
    %11 = vsyncpa [#allocation4], 0
    // Predicated region
    $region2: #{tpu_custom_call.1} parent=1 // pred_check
      _
    $region3: #{tpu_custom_call.1} parent=1 // pred_check_branch
      %13 = sbr.rel (0) target = $region5
    $region4: #{tpu_custom_call.1} parent=1 // pred_region
      %s15 = ssub.s32 256, 256
      %16 = vsyncadd [#allocation3], %s15
      %s17 = sshll.u32 [#allocation2], 4
      %s18 = int_to_ptr.vmem [resolvable:$true] %s17
      %23 = dma.hbm_to_vmem [thread:$0]  %s0, 256, %s18, [#allocation3], 128, 128, 8
    $region5: #{tpu_custom_call.1} parent=1 // pred_fallthru
      _
    // Predicated region
    $region6: #{tpu_custom_call.1} parent=1 // pred_check
      _
    $region7: #{tpu_custom_call.1} parent=1 // pred_check_branch
      %25 = sbr.rel (0) target = $region9
    $region8: #{tpu_custom_call.1} parent=1 // pred_region
      %s27 = ssub.s32 64, 64
      %28 = vsyncadd [#allocation5], %s27
      %31 = dma.hbm_to_smem %s1, 64, [#allocation7], [#allocation5]
    $region9: #{tpu_custom_call.1} parent=1 // pred_fallthru
      _
    // Predicated region
    $region10: #{tpu_custom_call.1} parent=1 // pred_check
      _
    $region11: #{tpu_custom_call.1} parent=1 // pred_check_branch
      %33 = sbr.rel (0) target = $region13
    $region12: #{tpu_custom_call.1} parent=1 // pred_region
      %s35 = ssub.s32 16, 16
      %36 = vsyncadd [#allocation6], %s35
      %s38 = sshll.u32 %s2, 4
      %s39 = int_to_ptr.vmem [resolvable:$true] %s38
      %41 = dma.vmem_to_smem %s39, 16, [#allocation8], [#allocation6]
    $region13: #{tpu_custom_call.1} parent=1 // pred_fallthru
      _
    // Predicated region
    $region14: #{tpu_custom_call.1} parent=1 // pred_check
      _
    $region15: #{tpu_custom_call.1} parent=1 // pred_check_branch
      %43 = sbr.rel (0) target = $region17
    $region16: #{tpu_custom_call.1} parent=1 // pred_region
      %44 = dma.done [#allocation3], 256
    $region17: #{tpu_custom_call.1} parent=1 // pred_fallthru
      _
    // Predicated region
    $region18: #{tpu_custom_call.1} parent=1 // pred_check
      _
    $region19: #{tpu_custom_call.1} parent=1 // pred_check_branch
      %46 = sbr.rel (0) target = $region21
    $region20: #{tpu_custom_call.1} parent=1 // pred_region
      %47 = dma.done [#allocation5], 64
    $region21: #{tpu_custom_call.1} parent=1 // pred_fallthru
      _
    // Predicated region
    $region22: #{tpu_custom_call.1} parent=1 // pred_check
      _
    $region23: #{tpu_custom_call.1} parent=1 // pred_check_branch
      %49 = sbr.rel (0) target = $region25
    $region24: #{tpu_custom_call.1} parent=1 // pred_region
      %50 = dma.done [#allocation6], 16
    $region25: #{tpu_custom_call.1} parent=1 // pred_fallthru
      _
    %51 = sfence
    %v52 = vld [vmem:[#allocation2] sm:$0xff]
    %v53 = vld [vmem:[#allocation2 + $0x8] sm:$0xff]
    %s54 = sld [smem:[#allocation7]]
    %v55 = vstv %s54
    %v56 = vmul.f32 %v52, %v55
    %v57 = vmul.f32 %v53, %v55
    %s58 = sld [smem:[#allocation7 + $0x1]]
    %v59 = vstv %s58
    %v60 = vmul.f32 %v52, %v59
    %v61 = vmul.f32 %v53, %v59
    %v64 = vrot.slane %v60, 5
    %v65 = vrot.slane %v64, 4
    %v66 = vrot.slane %v61, 5
    %v67 = vrot.slane %v66, 4
    %v70 = vadd.f32 %v56, %v65
    %v71 = vadd.f32 %v57, %v67
    %s72 = sld [smem:[#allocation7 + $0x2]]
    %v73 = vstv %s72
    %v74 = vmul.f32 %v52, %v73
    %v75 = vmul.f32 %v53, %v73
    %v78 = vrot.slane %v74, 6
    %v79 = vrot.slane %v78, 4
    %v80 = vrot.slane %v75, 6
    %v81 = vrot.slane %v80, 4
    %v84 = vadd.f32 %v70, %v79
    %v85 = vadd.f32 %v71, %v81
    %s86 = sld [smem:[#allocation7 + $0x3]]
    %v87 = vstv %s86
    %v88 = vmul.f32 %v52, %v87
    %v89 = vmul.f32 %v53, %v87
    %v92 = vrot.slane %v88, 7
    %v93 = vrot.slane %v92, 4
    %v94 = vrot.slane %v89, 7
    %v95 = vrot.slane %v94, 4
    %v98 = vadd.f32 %v84, %v93
    %v99 = vadd.f32 %v85, %v95
    %s100 = sld [smem:[#allocation8]]
    %v101 = vstv %s100
    %v102 = vadd.f32 %v98, %v101
    %v103 = vadd.f32 %v99, %v101
    %v104 = vxor.u32 %v102, 2147483648
    %v105 = vxor.u32 %v103, 2147483648
    %v106 = vmul.f32 %v104, 1.442695
    %v107 = vpow.pop %v106
    %v108 = vmul.f32 %v105, 1.442695
    %v109 = vpow.pop %v108
    %v110 = vadd.f32 %v107, 1.0
    %v111 = vadd.f32 %v109, 1.0
    %v112 = vrcp.pop %v110
    %v113 = vmul.f32 1.0, %v112
    %v114 = vrcp.pop %v111
    %v115 = vmul.f32 1.0, %v114
    %v116 = vmul.f32 %v52, %v113
    %v117 = vmul.f32 %v53, %v115
    %v121 = vunpack.c.l.s4 1966171168
    %v122 = vunpack.c.0.s8 %v121
    %v123 = vlaneseq
    %v124 = vshrl.u32 %v123, 7
    %v125 = vsub.s32 %v122, %v124
    %v126 = vrot.slane %v116, %v125
    %v128 = vunpack.c.l.s4 1966171168
    %v129 = vunpack.c.0.s8 %v128
    %v130 = vlaneseq
    %v131 = vshrl.u32 %v130, 7
    %v132 = vsub.s32 %v129, %v131
    %v133 = vrot.slane %v126, %v132
    %v135 = vunpack.c.l.s4 1966171168
    %v136 = vunpack.c.0.s8 %v135
    %v137 = vlaneseq
    %v138 = vshrl.u32 %v137, 7
    %v139 = vsub.s32 %v136, %v138
    %v140 = vrot.slane %v117, %v139
    %v142 = vunpack.c.l.s4 1966171168
    %v143 = vunpack.c.0.s8 %v142
    %v144 = vlaneseq
    %v145 = vshrl.u32 %v144, 7
    %v146 = vsub.s32 %v143, %v145
    %v147 = vrot.slane %v140, %v146
    %v150 = vlaneseq
    %vm151 = vcmp.ge.s32.totalorder %v150, 0
    %vm152 = vcmp.lt.s32.totalorder %v150, 256
    %vm153 = vmand %vm151, %vm152
    %154 = vst.msk [vmem:[#allocation9] ss:$4 sm:$0x3] %vm153, %v133
    %s155 = scalar_lea.vmem [#allocation9], 8
    %156 = vst.msk [vmem:[%s155] ss:$4 sm:$0x3] %vm153, %v147
    %s157 = sld [smem:[#allocation7 + $0x80]]
    %v158 = vstv %s157
    %v159 = vmul.f32 %v52, %v158
    %v160 = vmul.f32 %v53, %v158
    %s161 = sld [smem:[#allocation7 + $0x81]]
    %v162 = vstv %s161
    %v163 = vmul.f32 %v52, %v162
    %v164 = vmul.f32 %v53, %v162
    %v167 = vrot.slane %v163, 5
    %v168 = vrot.slane %v167, 4
    %v169 = vrot.slane %v164, 5
    %v170 = vrot.slane %v169, 4
    %v173 = vadd.f32 %v159, %v168
    %v174 = vadd.f32 %v160, %v170
    %s175 = sld [smem:[#allocation7 + $0x82]]
    %v176 = vstv %s175
    %v177 = vmul.f32 %v52, %v176
    %v178 = vmul.f32 %v53, %v176
    %v181 = vrot.slane %v177, 6
    %v182 = vrot.slane %v181, 4
    %v183 = vrot.slane %v178, 6
    %v184 = vrot.slane %v183, 4
    %v187 = vadd.f32 %v173, %v182
    %v188 = vadd.f32 %v174, %v184
    %s189 = sld [smem:[#allocation7 + $0x83]]
    %v190 = vstv %s189
    %v191 = vmul.f32 %v52, %v190
    %v192 = vmul.f32 %v53, %v190
    %v195 = vrot.slane %v191, 7
    %v196 = vrot.slane %v195, 4
    %v197 = vrot.slane %v192, 7
    %v198 = vrot.slane %v197, 4
    %v201 = vadd.f32 %v187, %v196
    %v202 = vadd.f32 %v188, %v198
    %s203 = sld [smem:[#allocation8 + $0x1]]
    %v204 = vstv %s203
    %v205 = vadd.f32 %v201, %v204
    %v206 = vadd.f32 %v202, %v204
    %v207 = vxor.u32 %v205, 2147483648
    %v208 = vxor.u32 %v206, 2147483648
    %v209 = vmul.f32 %v207, 1.442695
    %v210 = vpow.pop %v209
    %v211 = vmul.f32 %v208, 1.442695
    %v212 = vpow.pop %v211
    %v213 = vadd.f32 %v210, 1.0
    %v214 = vadd.f32 %v212, 1.0
    %v215 = vrcp.pop %v213
    %v216 = vmul.f32 1.0, %v215
    %v217 = vrcp.pop %v214
    %v218 = vmul.f32 1.0, %v217
    %v221 = vrot.slane %v216, 7
    %v222 = vrot.slane %v218, 7
    %v225 = vmul.f32 %v52, %v221
    %v226 = vmul.f32 %v53, %v222
    %v230 = vunpack.c.l.s4 1966171168
    %v231 = vunpack.c.0.s8 %v230
    %v232 = vlaneseq
    %v233 = vshrl.u32 %v232, 7
    %v234 = vsub.s32 %v231, %v233
    %v235 = vrot.slane %v225, %v234
    %v236 = vcombine.high %v235, %v235
    %v238 = vunpack.c.l.s4 1966171168
    %v239 = vunpack.c.0.s8 %v238
    %v240 = vlaneseq
    %v241 = vshrl.u32 %v240, 7
    %v242 = vsub.s32 %v239, %v241
    %v243 = vrot.slane %v236, %v242
    %v245 = vunpack.c.l.s4 1966171168
    %v246 = vunpack.c.0.s8 %v245
    %v247 = vlaneseq
    %v248 = vshrl.u32 %v247, 7
    %v249 = vsub.s32 %v246, %v248
    %v250 = vrot.slane %v226, %v249
    %v251 = vcombine.high %v250, %v250
    %v253 = vunpack.c.l.s4 1966171168
    %v254 = vunpack.c.0.s8 %v253
    %v255 = vlaneseq
    %v256 = vshrl.u32 %v255, 7
    %v257 = vsub.s32 %v254, %v256
    %v258 = vrot.slane %v251, %v257
    %s261 = scalar_lea.vmem [#allocation9], 1
    %262 = vst.msk [vmem:[%s261] ss:$4 sm:$0x3] %vm153, %v243
    %s263 = scalar_lea.vmem [#allocation9], 9
    %264 = vst.msk [vmem:[%s263] ss:$4 sm:$0x3] %vm153, %v258
    %s265 = sld [smem:[#allocation7 + $0x100]]
    %v266 = vstv %s265
    %v267 = vmul.f32 %v52, %v266
    %v268 = vmul.f32 %v53, %v266
    %s269 = sld [smem:[#allocation7 + $0x101]]
    %v270 = vstv %s269
    %v271 = vmul.f32 %v52, %v270
    %v272 = vmul.f32 %v53, %v270
    %v275 = vrot.slane %v271, 5
    %v276 = vrot.slane %v275, 4
    %v277 = vrot.slane %v272, 5
    %v278 = vrot.slane %v277, 4
    %v281 = vadd.f32 %v267, %v276
    %v282 = vadd.f32 %v268, %v278
    %s283 = sld [smem:[#allocation7 + $0x102]]
    %v284 = vstv %s283
    %v285 = vmul.f32 %v52, %v284
    %v286 = vmul.f32 %v53, %v284
    %v289 = vrot.slane %v285, 6
    %v290 = vrot.slane %v289, 4
    %v291 = vrot.slane %v286, 6
    %v292 = vrot.slane %v291, 4
    %v295 = vadd.f32 %v281, %v290
    %v296 = vadd.f32 %v282, %v292
    %s297 = sld [smem:[#allocation7 + $0x103]]
    %v298 = vstv %s297
    %v299 = vmul.f32 %v52, %v298
    %v300 = vmul.f32 %v53, %v298
    %v303 = vrot.slane %v299, 7
    %v304 = vrot.slane %v303, 4
    %v305 = vrot.slane %v300, 7
    %v306 = vrot.slane %v305, 4
    %v309 = vadd.f32 %v295, %v304
    %v310 = vadd.f32 %v296, %v306
    %s311 = sld [smem:[#allocation8 + $0x2]]
    %v312 = vstv %s311
    %v313 = vadd.f32 %v309, %v312
    %v314 = vadd.f32 %v310, %v312
    %v315 = vxor.u32 %v313, 2147483648
    %v316 = vxor.u32 %v314, 2147483648
    %v317 = vmul.f32 %v315, 1.442695
    %v318 = vpow.pop %v317
    %v319 = vmul.f32 %v316, 1.442695
    %v320 = vpow.pop %v319
    %v321 = vadd.f32 %v318, 1.0
    %v322 = vadd.f32 %v320, 1.0
    %v323 = vrcp.pop %v321
    %v324 = vmul.f32 1.0, %v323
    %v325 = vrcp.pop %v322
    %v326 = vmul.f32 1.0, %v325
    %v329 = vrot.slane %v324, 6
    %v330 = vrot.slane %v326, 6
    %v333 = vmul.f32 %v52, %v329
    %v334 = vmul.f32 %v53, %v330
    %v338 = vunpack.c.l.s4 1966171168
    %v339 = vunpack.c.0.s8 %v338
    %v340 = vlaneseq
    %v341 = vshrl.u32 %v340, 7
    %v342 = vsub.s32 %v339, %v341
    %v343 = vrot.slane %v333, %v342
    %v345 = vunpack.c.l.s4 1966171168
    %v346 = vunpack.c.0.s8 %v345
    %v347 = vlaneseq
    %v348 = vshrl.u32 %v347, 7
    %v349 = vsub.s32 %v346, %v348
    %v350 = vrot.slane %v343, %v349
    %v351 = vcombine.high %v350, %v350
    %v353 = vunpack.c.l.s4 1966171168
    %v354 = vunpack.c.0.s8 %v353
    %v355 = vlaneseq
    %v356 = vshrl.u32 %v355, 7
    %v357 = vsub.s32 %v354, %v356
    %v358 = vrot.slane %v334, %v357
    %v360 = vunpack.c.l.s4 1966171168
    %v361 = vunpack.c.0.s8 %v360
    %v362 = vlaneseq
    %v363 = vshrl.u32 %v362, 7
    %v364 = vsub.s32 %v361, %v363
    %v365 = vrot.slane %v358, %v364
    %v366 = vcombine.high %v365, %v365
    %s369 = scalar_lea.vmem [#allocation9], 2
    %370 = vst.msk [vmem:[%s369] ss:$4 sm:$0x3] %vm153, %v351
    %s371 = scalar_lea.vmem [#allocation9], 10
    %372 = vst.msk [vmem:[%s371] ss:$4 sm:$0x3] %vm153, %v366
    %s373 = sld [smem:[#allocation7 + $0x180]]
    %v374 = vstv %s373
    %v375 = vmul.f32 %v52, %v374
    %v376 = vmul.f32 %v53, %v374
    %s377 = sld [smem:[#allocation7 + $0x181]]
    %v378 = vstv %s377
    %v379 = vmul.f32 %v52, %v378
    %v380 = vmul.f32 %v53, %v378
    %v383 = vrot.slane %v379, 5
    %v384 = vrot.slane %v383, 4
    %v385 = vrot.slane %v380, 5
    %v386 = vrot.slane %v385, 4
    %v389 = vadd.f32 %v375, %v384
    %v390 = vadd.f32 %v376, %v386
    %s391 = sld [smem:[#allocation7 + $0x182]]
    %v392 = vstv %s391
    %v393 = vmul.f32 %v52, %v392
    %v394 = vmul.f32 %v53, %v392
    %v397 = vrot.slane %v393, 6
    %v398 = vrot.slane %v397, 4
    %v399 = vrot.slane %v394, 6
    %v400 = vrot.slane %v399, 4
    %v403 = vadd.f32 %v389, %v398
    %v404 = vadd.f32 %v390, %v400
    %s405 = sld [smem:[#allocation7 + $0x183]]
    %v406 = vstv %s405
    %v407 = vmul.f32 %v52, %v406
    %v408 = vmul.f32 %v53, %v406
    %v411 = vrot.slane %v407, 7
    %v412 = vrot.slane %v411, 4
    %v413 = vrot.slane %v408, 7
    %v414 = vrot.slane %v413, 4
    %v417 = vadd.f32 %v403, %v412
    %v418 = vadd.f32 %v404, %v414
    %s419 = sld [smem:[#allocation8 + $0x3]]
    %v420 = vstv %s419
    %v421 = vadd.f32 %v417, %v420
    %v422 = vadd.f32 %v418, %v420
    %v423 = vxor.u32 %v421, 2147483648
    %v424 = vxor.u32 %v422, 2147483648
    %v425 = vmul.f32 %v423, 1.442695
    %v426 = vpow.pop %v425
    %v427 = vmul.f32 %v424, 1.442695
    %v428 = vpow.pop %v427
    %v429 = vadd.f32 %v426, 1.0
    %v430 = vadd.f32 %v428, 1.0
    %v431 = vrcp.pop %v429
    %v432 = vmul.f32 1.0, %v431
    %v433 = vrcp.pop %v430
    %v434 = vmul.f32 1.0, %v433
    %v437 = vrot.slane %v432, 5
    %v438 = vrot.slane %v434, 5
    %v441 = vmul.f32 %v52, %v437
    %v442 = vmul.f32 %v53, %v438
    %v446 = vunpack.c.l.s4 1966171168
    %v447 = vunpack.c.0.s8 %v446
    %v448 = vlaneseq
    %v449 = vshrl.u32 %v448, 7
    %v450 = vsub.s32 %v447, %v449
    %v451 = vrot.slane %v441, %v450
    %v452 = vcombine.high %v451, %v451
    %v454 = vunpack.c.l.s4 1966171168
    %v455 = vunpack.c.0.s8 %v454
    %v456 = vlaneseq
    %v457 = vshrl.u32 %v456, 7
    %v458 = vsub.s32 %v455, %v457
    %v459 = vrot.slane %v452, %v458
    %v460 = vcombine.high %v459, %v459
    %v462 = vunpack.c.l.s4 1966171168
    %v463 = vunpack.c.0.s8 %v462
    %v464 = vlaneseq
    %v465 = vshrl.u32 %v464, 7
    %v466 = vsub.s32 %v463, %v465
    %v467 = vrot.slane %v442, %v466
    %v468 = vcombine.high %v467, %v467
    %v470 = vunpack.c.l.s4 1966171168
    %v471 = vunpack.c.0.s8 %v470
    %v472 = vlaneseq
    %v473 = vshrl.u32 %v472, 7
    %v474 = vsub.s32 %v471, %v473
    %v475 = vrot.slane %v468, %v474
    %v476 = vcombine.high %v475, %v475
    %s479 = scalar_lea.vmem [#allocation9], 3
    %480 = vst.msk [vmem:[%s479] ss:$4 sm:$0x3] %vm153, %v460
    %s481 = scalar_lea.vmem [#allocation9], 11
    %482 = vst.msk [vmem:[%s481] ss:$4 sm:$0x3] %vm153, %v476
    // Predicated region
    $region26: #{tpu_custom_call.1} parent=1 // pred_check
      _
    $region27: #{tpu_custom_call.1} parent=1 // pred_check_branch
      %484 = sbr.rel (0) target = $region29
    $region28: #{tpu_custom_call.1} parent=1 // pred_region
      %s486 = ssub.s32 256, 256
      %487 = vsyncadd [#allocation4], %s486
      %s488 = sshll.u32 [#allocation9], 4
      %s489 = int_to_ptr.vmem [resolvable:$true] %s488
      %494 = dma.vmem_to_hbm [thread:$0]  %s489, 256, %s3, [#allocation4], 128, 128, 8
    $region29: #{tpu_custom_call.1} parent=1 // pred_fallthru
      _
    // Predicated region
    $region30: #{tpu_custom_call.1} parent=1 // pred_check
      _
    $region31: #{tpu_custom_call.1} parent=1 // pred_check_branch
      %496 = sbr.rel (0) target = $region33
    $region32: #{tpu_custom_call.1} parent=1 // pred_region
      %497 = dma.done [#allocation4], 256
    $region33: #{tpu_custom_call.1} parent=1 // pred_fallthru
      _
    %498 = vsyncpa [#allocation3], 1
    %499 = vsyncpa [#allocation4], 1
    %500 = vsyncpa [#allocation5], 1
    %501 = vsyncpa [#allocation6], 1

</llo_original>
